<compile_context>
chip_gen: v7x
topology: tpu7x:2x2x1
jax: 0.10.0
libtpu: 0.0.40
codegen_flags: <defaults>
</compile_context>

<pallas_src>
import functools
import math

import jax
import jax.numpy as jnp
from jax.experimental import pallas as pl
from jax.experimental.pallas import tpu as pltpu


def _round_up(n: int, m: int) -> int:
    return ((n + m - 1) // m) * m


def _vmem_limit_cap() -> int:
    """Per-core VMEM capacity with ~25% headroom (fallback: 48 MiB)."""
    try:
        return int(pltpu.get_tpu_info().vmem_capacity_bytes * 3 // 4)
    except Exception:
        return 48 << 20


def _nnlinear_kernel(x_ref, u_ref, a_t_ref, b_t_ref, c_t_ref, dx_ref, y_ref):
    """One batch tile: dx = x@A^T + u@B^T,  y = x@C^T  (f32 accumulation)."""
    x = x_ref[...]
    u = u_ref[...]
    dx = jnp.dot(x, a_t_ref[...], preferred_element_type=jnp.float32)
    dx = dx + jnp.dot(u, b_t_ref[...], preferred_element_type=jnp.float32)
    dx_ref[...] = dx.astype(dx_ref.dtype)
    y_ref[...] = jnp.dot(
        x, c_t_ref[...], preferred_element_type=jnp.float32
    ).astype(y_ref.dtype)


def prepare_nnlinear_weights(A_w, B_w, C_w, compute_dtype=None):
    """Hoisted once per model: transpose PyTorch-layout weights for x @ W."""
    a_t = A_w.T  # (state_dim, state_dim)
    b_t = B_w.T  # (input_dim, state_dim)
    c_t = C_w.T  # (state_dim, output_dim)
    if compute_dtype is not None:
        a_t = a_t.astype(compute_dtype)
        b_t = b_t.astype(compute_dtype)
        c_t = c_t.astype(compute_dtype)
    return a_t, b_t, c_t


@functools.partial(jax.jit, static_argnames=("block_batch", "compute_dtype"))
def nnlinear_forward(u, x, a_t, b_t, c_t, *, block_batch=2048, compute_dtype=None):
    """Pallas forward pass of NNLinear.

    u: (batch, input_dim), x: (batch, state_dim)
    a_t/b_t/c_t: transposed weights from prepare_nnlinear_weights.
    Returns (dx, y) with shapes (batch, state_dim) / (batch, output_dim).
    """
    batch, input_dim = u.shape
    _, state_dim = x.shape
    output_dim = c_t.shape[1]
    out_dtype = x.dtype

    if compute_dtype is not None:
        x = x.astype(compute_dtype)
        u = u.astype(compute_dtype)
        a_t = a_t.astype(compute_dtype)
        b_t = b_t.astype(compute_dtype)
        c_t = c_t.astype(compute_dtype)

    kdtype = jnp.dtype(x.dtype)
    itemsize = kdtype.itemsize
    sublane = 16 if itemsize == 2 else 8  # bf16 packs 16 rows per vreg

    # --- batch tile: big enough to amortize step overhead, small enough that
    # --- the grid has >=2 steps whenever batch allows (v7x megacore).
    tm = _round_up(min(block_batch, batch), sublane)
    half = max(_round_up(pl.cdiv(batch, 2), sublane), sublane)
    tm = max(sublane, min(tm, half))
    grid = (pl.cdiv(batch, tm),)  # uneven last block: OOB rows masked by Pallas

    # Advisory cost (true flops / bytes) for XLA's scheduler.
    flops = 2 * batch * (
        state_dim * state_dim + state_dim * input_dim + state_dim * output_dim
    )
    bytes_accessed = itemsize * (
        u.size + x.size + a_t.size + b_t.size + c_t.size
    ) + jnp.dtype(out_dtype).itemsize * batch * (state_dim + output_dim)
    cost = pl.CostEstimate(
        flops=flops, transcendentals=0, bytes_accessed=bytes_accessed
    )

    # VMEM budget: double-buffered activation/output tiles + resident weights.
    vmem_bytes = (
        itemsize * (2 * tm * (state_dim + input_dim))
        + jnp.dtype(out_dtype).itemsize * (2 * tm * (state_dim + output_dim))
        + itemsize * 2 * (state_dim * state_dim
                          + input_dim * state_dim
                          + state_dim * output_dim)
    )
    vmem_limit = min(max(2 * vmem_bytes, 16 << 20), _vmem_limit_cap())

    dx, y = pl.pallas_call(
        _nnlinear_kernel,
        out_shape=(
            jax.ShapeDtypeStruct((batch, state_dim), out_dtype),
            jax.ShapeDtypeStruct((batch, output_dim), out_dtype),
        ),
        grid=grid,
        in_specs=[
            # batch-tiled activations, true (unpadded) feature widths
            pl.BlockSpec((tm, state_dim), lambda i: (i, 0)),
            pl.BlockSpec((tm, input_dim), lambda i: (i, 0)),
            # VMEM-resident weights (constant index_map -> fetched once)
            pl.BlockSpec((state_dim, state_dim), lambda i: (0, 0)),
            pl.BlockSpec((input_dim, state_dim), lambda i: (0, 0)),
            pl.BlockSpec((state_dim, output_dim), lambda i: (0, 0)),
        ],
        out_specs=(
            pl.BlockSpec((tm, state_dim), lambda i: (i, 0)),
            pl.BlockSpec((tm, output_dim), lambda i: (i, 0)),
        ),
        compiler_params=pltpu.CompilerParams(
            dimension_semantics=("parallel",),  # megacore sharding on v7x
            vmem_limit_bytes=int(vmem_limit),
        ),
        cost_estimate=cost,
    )(x, u, a_t, b_t, c_t)
    return dx, y


def _init_linear_weight(key, out_features, in_features, dtype=jnp.float32):
    # PyTorch-like kaiming-uniform bound: U(-1/sqrt(fan_in), 1/sqrt(fan_in)).
    bound = 1.0 / math.sqrt(in_features)
    return jax.random.uniform(
        key, (out_features, in_features), dtype=dtype, minval=-bound, maxval=bound
    )


if __name__ == "__main__":
    input_dim = 4
    state_dim = 32
    output_dim = 8

    key = jax.random.PRNGKey(0)
    k_a, k_b, k_c = jax.random.split(key, 3)

    A_w = _init_linear_weight(k_a, state_dim, state_dim)
    B_w = _init_linear_weight(k_b, state_dim, input_dim)
    C_w = _init_linear_weight(k_c, output_dim, state_dim)

    # Weight layout plumbing hoisted out of the per-call forward.
    weights = prepare_nnlinear_weights(A_w, B_w, C_w)

    ok = True
    # batch=2 matches the original toy usage; batch=260 with block_batch=128
    # exercises a multi-step grid with an uneven (masked) last block.
    for batch, block_batch in ((2, 2048), (260, 128)):
        k_u2, k_x2 = jax.random.split(jax.random.fold_in(key, batch))
        u = jax.random.normal(k_u2, (batch, input_dim), dtype=jnp.float32)
        x = jax.random.normal(k_x2, (batch, state_dim), dtype=jnp.float32)

        dx, y = nnlinear_forward(u, x, *weights, block_batch=block_batch)
        jax.block_until_ready((dx, y))

        # Reference check in plain JAX (same semantics as the PyTorch module).
        dx_ref = x @ A_w.T + u @ B_w.T
        y_ref = x @ C_w.T
        ok &= bool(jnp.allclose(dx, dx_ref, atol=1e-5, rtol=1e-5))
        ok &= bool(jnp.allclose(y, y_ref, atol=1e-5, rtol=1e-5))

    assert ok
    print("KERNEL_OK")
</pallas_src>

<mosaic_0001>
module attributes {stable_mosaic.version = 11 : i64} {
  func.func @_nnlinear_kernel(%arg0: i32, %arg1: memref<8x32xf32, #tpu.memory_space<vmem>>, %arg2: memref<8x4xf32, #tpu.memory_space<vmem>>, %arg3: memref<32x32xf32, #tpu.memory_space<vmem>>, %arg4: memref<4x32xf32, #tpu.memory_space<vmem>>, %arg5: memref<32x8xf32, #tpu.memory_space<vmem>>, %arg6: memref<8x32xf32, #tpu.memory_space<vmem>>, %arg7: memref<8x8xf32, #tpu.memory_space<vmem>>) attributes {dimension_semantics = [#tpu.dimension_semantics<parallel>], iteration_bounds = array<i64: 1>, scalar_prefetch = 0 : i64, scratch_operands = 0 : i64, tpu.core_type = #tpu.core_type<tc>, window_params = [{transform_indices = @transform_0, window_bounds = array<i64: 8, 32>}, {transform_indices = @transform_1, window_bounds = array<i64: 8, 4>}, {pipeline_mode = #tpu.pipeline_mode<synchronous>, transform_indices = @transform_2, window_bounds = array<i64: 32, 32>}, {pipeline_mode = #tpu.pipeline_mode<synchronous>, transform_indices = @transform_3, window_bounds = array<i64: 4, 32>}, {pipeline_mode = #tpu.pipeline_mode<synchronous>, transform_indices = @transform_4, window_bounds = array<i64: 32, 8>}, {transform_indices = @transform_5, window_bounds = array<i64: 8, 32>}, {transform_indices = @transform_6, window_bounds = array<i64: 8, 8>}]} {
    %c0 = arith.constant 0 : index
    %c0_0 = arith.constant 0 : index
    %0 = vector.load %arg1[%c0, %c0_0] : memref<8x32xf32, #tpu.memory_space<vmem>>, vector<8x32xf32>
    %c0_1 = arith.constant 0 : index
    %c0_2 = arith.constant 0 : index
    %1 = vector.load %arg2[%c0_1, %c0_2] : memref<8x4xf32, #tpu.memory_space<vmem>>, vector<8x4xf32>
    %c0_3 = arith.constant 0 : index
    %c0_4 = arith.constant 0 : index
    %2 = vector.load %arg3[%c0_3, %c0_4] : memref<32x32xf32, #tpu.memory_space<vmem>>, vector<32x32xf32>
    %cst = arith.constant dense<0.000000e+00> : vector<8x32xf32>
    %3 = tpu.matmul %0, %2, %cst {dimension_numbers = #tpu.dot_dimension_numbers<[1], [0], [0], [1], [0, 0, 1, 1], [], []>} : vector<8x32xf32>, vector<32x32xf32>, vector<8x32xf32> -> vector<8x32xf32>
    %c0_5 = arith.constant 0 : index
    %c0_6 = arith.constant 0 : index
    %4 = vector.load %arg4[%c0_5, %c0_6] : memref<4x32xf32, #tpu.memory_space<vmem>>, vector<4x32xf32>
    %cst_7 = arith.constant dense<0.000000e+00> : vector<8x32xf32>
    %5 = tpu.matmul %1, %4, %cst_7 {dimension_numbers = #tpu.dot_dimension_numbers<[1], [0], [0], [1], [0, 0, 1, 1], [], []>} : vector<8x4xf32>, vector<4x32xf32>, vector<8x32xf32> -> vector<8x32xf32>
    %6 = arith.addf %3, %5 : vector<8x32xf32>
    %c0_8 = arith.constant 0 : index
    %c0_9 = arith.constant 0 : index
    %7 = vector.load %arg6[%c0_8, %c0_9] : memref<8x32xf32, #tpu.memory_space<vmem>>, vector<8x32xf32>
    tpu.vector_store %arg6[%c0_8, %c0_9], %6 {strides = array<i32>} : memref<8x32xf32, #tpu.memory_space<vmem>>, vector<8x32xf32>,
    %c0_10 = arith.constant 0 : index
    %c0_11 = arith.constant 0 : index
    %8 = vector.load %arg5[%c0_10, %c0_11] : memref<32x8xf32, #tpu.memory_space<vmem>>, vector<32x8xf32>
    %cst_12 = arith.constant dense<0.000000e+00> : vector<8x8xf32>
    %9 = tpu.matmul %0, %8, %cst_12 {dimension_numbers = #tpu.dot_dimension_numbers<[1], [0], [0], [1], [0, 0, 1, 1], [], []>} : vector<8x32xf32>, vector<32x8xf32>, vector<8x8xf32> -> vector<8x8xf32>
    %c0_13 = arith.constant 0 : index
    %c0_14 = arith.constant 0 : index
    %10 = vector.load %arg7[%c0_13, %c0_14] : memref<8x8xf32, #tpu.memory_space<vmem>>, vector<8x8xf32>
    tpu.vector_store %arg7[%c0_13, %c0_14], %9 {strides = array<i32>} : memref<8x8xf32, #tpu.memory_space<vmem>>, vector<8x8xf32>,
    return
  }
  func.func @transform_0(%arg0: i32) -> (i32, i32) {
    %c0_i32 = arith.constant 0 : i32
    %c0_i32_0 = arith.constant 0 : i32
    return %arg0, %c0_i32 : i32, i32
  }
  func.func @transform_1(%arg0: i32) -> (i32, i32) {
    %c0_i32 = arith.constant 0 : i32
    %c0_i32_0 = arith.constant 0 : i32
    return %arg0, %c0_i32 : i32, i32
  }
  func.func @transform_2(%arg0: i32) -> (i32, i32) {
    %c0_i32 = arith.constant 0 : i32
    %c0_i32_0 = arith.constant 0 : i32
    %c0_i32_1 = arith.constant 0 : i32
    return %c0_i32, %c0_i32_0 : i32, i32
  }
  func.func @transform_3(%arg0: i32) -> (i32, i32) {
    %c0_i32 = arith.constant 0 : i32
    %c0_i32_0 = arith.constant 0 : i32
    %c0_i32_1 = arith.constant 0 : i32
    return %c0_i32, %c0_i32_0 : i32, i32
  }
  func.func @transform_4(%arg0: i32) -> (i32, i32) {
    %c0_i32 = arith.constant 0 : i32
    %c0_i32_0 = arith.constant 0 : i32
    %c0_i32_1 = arith.constant 0 : i32
    return %c0_i32, %c0_i32_0 : i32, i32
  }
  func.func @transform_5(%arg0: i32) -> (i32, i32) {
    %c0_i32 = arith.constant 0 : i32
    %c0_i32_0 = arith.constant 0 : i32
    return %arg0, %c0_i32 : i32, i32
  }
  func.func @transform_6(%arg0: i32) -> (i32, i32) {
    %c0_i32 = arith.constant 0 : i32
    %c0_i32_0 = arith.constant 0 : i32
    return %arg0, %c0_i32 : i32, i32
  }
}

</mosaic_0001>

<llo_original>
// kernel: nnlinear_forward.1
$region0: #{nnlinear_forward.1}
  #allocation0 [shape = 'u32[]', space=smem, size = 0x4, offset = 0x4, fixed_abs, tag = 'smem constant byte address 0x4 - core index']
  #allocation1 [shape = 'u32[144,128]{1,0:T(1,128)}', space=vmem, size = 0x12000, scoped, tag = 'internal scratch']
  %s0 = inlined_call_operand.vmem [shape: f32[2,32], index: 0, kind: input, shape index: {}]
  %s1 = inlined_call_operand.vmem [shape: f32[2,4], index: 1, kind: input, shape index: {}]
  %s2 = inlined_call_operand.vmem [shape: f32[32,32], index: 2, kind: input, shape index: {}]
  %s3 = inlined_call_operand.vmem [shape: f32[4,32], index: 3, kind: input, shape index: {}]
  %s4 = inlined_call_operand.vmem [shape: f32[32,8], index: 4, kind: input, shape index: {}]
  %s5 = inlined_call_operand.hbm [shape: f32[2,32], index: 5, kind: output, shape index: {0}]
  %s6 = inlined_call_operand.hbm [shape: f32[2,8], index: 6, kind: output, shape index: {1}]
  %7 = xla_tuple %s5, %s6
  %s8 = sld [smem:[#allocation0]]
  $region38: #{nnlinear_forward.1} parent=0
    _
  %s10 = ssub.s32 1, %s8
  %s11 = scalar_select 0, %s10, %s8
  $region1: #{nnlinear_forward.1} parent=0
    #allocation2 [shape = 'u8[4096]{0}', space=vmem, size = 0x1000, scoped, tag = 'output window, operand 0, single buffered']
    #allocation3 [shape = 's32[1]{0}', space=sflag, size = 0x4, scoped, tag = 'scoped memory for nnlinear_forward.1']
    #allocation4 [shape = 'u8[4096]{0}', space=vmem, size = 0x1000, scoped, tag = 'output window, operand 1, single buffered']
    #allocation5 [shape = 's32[1]{0}', space=sflag, size = 0x4, scoped, tag = 'scoped memory for nnlinear_forward.1']
    %12 = vsyncpa [#allocation3], 0
    %13 = vsyncpa [#allocation5], 0
    // Predicated region
    $region2: #{nnlinear_forward.1} parent=1 // pred_check
      _
    $region3: #{nnlinear_forward.1} parent=1 // pred_check_branch
      %15 = sbr.rel (0) target = $region5
    $region4: #{nnlinear_forward.1} parent=1 // pred_region
      _
    $region5: #{nnlinear_forward.1} parent=1 // pred_fallthru
      _
    // Predicated region
    $region6: #{nnlinear_forward.1} parent=1 // pred_check
      _
    $region7: #{nnlinear_forward.1} parent=1 // pred_check_branch
      %17 = sbr.rel (0) target = $region9
    $region8: #{nnlinear_forward.1} parent=1 // pred_region
      _
    $region9: #{nnlinear_forward.1} parent=1 // pred_fallthru
      _
    // Predicated region
    $region10: #{nnlinear_forward.1} parent=1 // pred_check
      _
    $region11: #{nnlinear_forward.1} parent=1 // pred_check_branch
      %19 = sbr.rel (0) target = $region13
    $region12: #{nnlinear_forward.1} parent=1 // pred_region
      _
    $region13: #{nnlinear_forward.1} parent=1 // pred_fallthru
      _
    // Predicated region
    $region14: #{nnlinear_forward.1} parent=1 // pred_check
      _
    $region15: #{nnlinear_forward.1} parent=1 // pred_check_branch
      %21 = sbr.rel (0) target = $region17
    $region16: #{nnlinear_forward.1} parent=1 // pred_region
      _
    $region17: #{nnlinear_forward.1} parent=1 // pred_fallthru
      _
    // Predicated region
    $region18: #{nnlinear_forward.1} parent=1 // pred_check
      _
    $region19: #{nnlinear_forward.1} parent=1 // pred_check_branch
      %23 = sbr.rel (0) target = $region21
    $region20: #{nnlinear_forward.1} parent=1 // pred_region
      _
    $region21: #{nnlinear_forward.1} parent=1 // pred_fallthru
      _
    %v24 = vld [vmem:[%s0] sm:$0xff]
    %v25 = vld [vmem:[%s1] sm:$0xff]
    %v26 = vld [vmem:[%s2] sm:$0xff]
    %v27 = vld [vmem:[%s2 + $0x8] sm:$0xff]
    %v28 = vld [vmem:[%s2 + $0x10] sm:$0xff]
    %v29 = vld [vmem:[%s2 + $0x18] sm:$0xff]
    %v30 = vld [vmem:[%s3] sm:$0xf]
    %vm31 = vcmask 31744
    %v33 = vsel %vm31, %v25, 0
    %vm35 = vcmask 1043456
    %v37 = vsel %vm35, %v30, 0
    %39 = vmatprep.subr.mxu0 0.0
    %40 = vmatpush1.msra.mxu0 %v37
    %41 = vmatprep.subr.mxu0 0.0
    %42 = vmatpush1.msra.mxu0 0.0
    %43 = vmatprep.subr.mxu0 0.0
    %44 = vmatpush1.msra.mxu0 0.0
    %45 = vmatprep.subr.mxu0 0.0
    %46 = vmatpush1.msra.mxu0 0.0
    %47 = vmatprep.subr.mxu0 0.0
    %48 = vmatpush1.msra.mxu0 0.0
    %49 = vmatprep.subr.mxu0 0.0
    %50 = vmatpush1.msra.mxu0 0.0
    %51 = vmatprep.subr.mxu0 0.0
    %52 = vmatpush1.msra.mxu0 0.0
    %53 = vmatprep.subr.mxu0 0.0
    %54 = vmatpush1.msra.mxu0 0.0
    %55 = vmatprep.subr.mxu0 0.0
    %56 = vmatpush1.msra.mxu0 0.0
    %57 = vmatprep.subr.mxu0 0.0
    %58 = vmatpush1.msra.mxu0 0.0
    %59 = vmatprep.subr.mxu0 0.0
    %60 = vmatpush1.msra.mxu0 0.0
    %61 = vmatprep.subr.mxu0 0.0
    %62 = vmatpush1.msra.mxu0 0.0
    %63 = vmatprep.subr.mxu0 0.0
    %64 = vmatpush1.msra.mxu0 0.0
    %65 = vmatprep.subr.mxu0 0.0
    %66 = vmatpush1.msra.mxu0 0.0
    %67 = vmatprep.subr.mxu0 0.0
    %68 = vmatpush1.msra.mxu0 0.0
    %69 = vmatprep.subr.mxu0 0.0
    %70 = vmatpush1.msra.mxu0 0.0
    %71 = vmatprep.subr.mxu0 0.0
    %72 = vmatpush1.msra.mxu0 0.0
    %73 = vmatprep.subr.mxu0 0.0
    %74 = vmatpush1.msra.mxu0 0.0
    %75 = vmatprep.subr.mxu0 0.0
    %76 = vmatpush1.msra.mxu0 0.0
    %77 = vmatprep.subr.mxu0 0.0
    %78 = vmatpush1.msra.mxu0 0.0
    %79 = vmatprep.subr.mxu0 0.0
    %80 = vmatpush1.msra.mxu0 0.0
    %81 = vmatprep.subr.mxu0 0.0
    %82 = vmatpush1.msra.mxu0 0.0
    %83 = vmatprep.subr.mxu0 0.0
    %84 = vmatpush1.msra.mxu0 0.0
    %85 = vmatprep.subr.mxu0 0.0
    %86 = vmatpush1.msra.mxu0 0.0
    %87 = vmatprep.subr.mxu0 0.0
    %88 = vmatpush1.msra.mxu0 0.0
    %89 = vmatprep.subr.mxu0 0.0
    %90 = vmatpush1.msra.mxu0 0.0
    %91 = vmatprep.subr.mxu0 0.0
    %92 = vmatpush1.msra.mxu0 0.0
    %93 = vmatprep.subr.mxu0 0.0
    %94 = vmatpush1.msra.mxu0 0.0
    %95 = vmatprep.subr.mxu0 0.0
    %96 = vmatpush1.msra.mxu0 0.0
    %97 = vmatprep.subr.mxu0 0.0
    %98 = vmatpush1.msra.mxu0 0.0
    %99 = vmatprep.subr.mxu0 0.0
    %100 = vmatpush1.msra.mxu0 0.0
    %101 = vmatprep.subr.mxu0 0.0
    %102 = vmatpush1.msra.mxu0 0.0
    %103 = vmatprep.mubr.f32.mxu0 0.0
    %104 = vmatmul.mubr.f32.gmra.mrb[0].mxu0 %v33
    %v105 = vpop.f32.mrb[0].mxu0
    %v106 = vadd.f32 0.0, %v105
    %v107 = vpop.f32.mrb[0].mxu0
    %108 = vdwg.mxu0
    %vm109 = vcmask 261120
    %v111 = vsel %vm109, %v24, 0
    %113 = vmatprep.subr.mxu0 0.0
    %114 = vmatpush1.msra.mxu0 %v26
    %115 = vmatprep.subr.mxu0 0.0
    %116 = vmatpush1.msra.mxu0 %v27
    %117 = vmatprep.subr.mxu0 0.0
    %118 = vmatpush1.msra.mxu0 %v28
    %119 = vmatprep.subr.mxu0 0.0
    %120 = vmatpush1.msra.mxu0 %v29
    %121 = vmatprep.subr.mxu0 0.0
    %122 = vmatpush1.msra.mxu0 0.0
    %123 = vmatprep.subr.mxu0 0.0
    %124 = vmatpush1.msra.mxu0 0.0
    %125 = vmatprep.subr.mxu0 0.0
    %126 = vmatpush1.msra.mxu0 0.0
    %127 = vmatprep.subr.mxu0 0.0
    %128 = vmatpush1.msra.mxu0 0.0
    %129 = vmatprep.subr.mxu0 0.0
    %130 = vmatpush1.msra.mxu0 0.0
    %131 = vmatprep.subr.mxu0 0.0
    %132 = vmatpush1.msra.mxu0 0.0
    %133 = vmatprep.subr.mxu0 0.0
    %134 = vmatpush1.msra.mxu0 0.0
    %135 = vmatprep.subr.mxu0 0.0
    %136 = vmatpush1.msra.mxu0 0.0
    %137 = vmatprep.subr.mxu0 0.0
    %138 = vmatpush1.msra.mxu0 0.0
    %139 = vmatprep.subr.mxu0 0.0
    %140 = vmatpush1.msra.mxu0 0.0
    %141 = vmatprep.subr.mxu0 0.0
    %142 = vmatpush1.msra.mxu0 0.0
    %143 = vmatprep.subr.mxu0 0.0
    %144 = vmatpush1.msra.mxu0 0.0
    %145 = vmatprep.subr.mxu0 0.0
    %146 = vmatpush1.msra.mxu0 0.0
    %147 = vmatprep.subr.mxu0 0.0
    %148 = vmatpush1.msra.mxu0 0.0
    %149 = vmatprep.subr.mxu0 0.0
    %150 = vmatpush1.msra.mxu0 0.0
    %151 = vmatprep.subr.mxu0 0.0
    %152 = vmatpush1.msra.mxu0 0.0
    %153 = vmatprep.subr.mxu0 0.0
    %154 = vmatpush1.msra.mxu0 0.0
    %155 = vmatprep.subr.mxu0 0.0
    %156 = vmatpush1.msra.mxu0 0.0
    %157 = vmatprep.subr.mxu0 0.0
    %158 = vmatpush1.msra.mxu0 0.0
    %159 = vmatprep.subr.mxu0 0.0
    %160 = vmatpush1.msra.mxu0 0.0
    %161 = vmatprep.subr.mxu0 0.0
    %162 = vmatpush1.msra.mxu0 0.0
    %163 = vmatprep.subr.mxu0 0.0
    %164 = vmatpush1.msra.mxu0 0.0
    %165 = vmatprep.subr.mxu0 0.0
    %166 = vmatpush1.msra.mxu0 0.0
    %167 = vmatprep.subr.mxu0 0.0
    %168 = vmatpush1.msra.mxu0 0.0
    %169 = vmatprep.subr.mxu0 0.0
    %170 = vmatpush1.msra.mxu0 0.0
    %171 = vmatprep.subr.mxu0 0.0
    %172 = vmatpush1.msra.mxu0 0.0
    %173 = vmatprep.subr.mxu0 0.0
    %174 = vmatpush1.msra.mxu0 0.0
    %175 = vmatprep.subr.mxu0 0.0
    %176 = vmatpush1.msra.mxu0 0.0
    %177 = vmatprep.mubr.f32.mxu0 0.0
    %178 = vmatmul.mubr.f32.gmra.mrb[0].mxu0 %v111
    %v179 = vpop.f32.mrb[0].mxu0
    %v180 = vadd.f32 %v106, %v179
    %v181 = vpop.f32.mrb[0].mxu0
    %182 = vdwg.mxu0
    %183 = vst.msk [vmem:[#allocation2] sm:$0xff] %vm109, %v180
    %v184 = vld [vmem:[%s4] sm:$0xff]
    %v185 = vld [vmem:[%s4 + $0x8] sm:$0xff]
    %v186 = vld [vmem:[%s4 + $0x10] sm:$0xff]
    %v187 = vld [vmem:[%s4 + $0x18] sm:$0xff]
    %188 = vmatprep.subr.mxu0 0.0
    %189 = vmatpush1.msra.mxu0 %v184
    %190 = vmatprep.subr.mxu0 0.0
    %191 = vmatpush1.msra.mxu0 %v185
    %192 = vmatprep.subr.mxu0 0.0
    %193 = vmatpush1.msra.mxu0 %v186
    %194 = vmatprep.subr.mxu0 0.0
    %195 = vmatpush1.msra.mxu0 %v187
    %196 = vmatprep.subr.mxu0 0.0
    %197 = vmatpush1.msra.mxu0 0.0
    %198 = vmatprep.subr.mxu0 0.0
    %199 = vmatpush1.msra.mxu0 0.0
    %200 = vmatprep.subr.mxu0 0.0
    %201 = vmatpush1.msra.mxu0 0.0
    %202 = vmatprep.subr.mxu0 0.0
    %203 = vmatpush1.msra.mxu0 0.0
    %204 = vmatprep.subr.mxu0 0.0
    %205 = vmatpush1.msra.mxu0 0.0
    %206 = vmatprep.subr.mxu0 0.0
    %207 = vmatpush1.msra.mxu0 0.0
    %208 = vmatprep.subr.mxu0 0.0
    %209 = vmatpush1.msra.mxu0 0.0
    %210 = vmatprep.subr.mxu0 0.0
    %211 = vmatpush1.msra.mxu0 0.0
    %212 = vmatprep.subr.mxu0 0.0
    %213 = vmatpush1.msra.mxu0 0.0
    %214 = vmatprep.subr.mxu0 0.0
    %215 = vmatpush1.msra.mxu0 0.0
    %216 = vmatprep.subr.mxu0 0.0
    %217 = vmatpush1.msra.mxu0 0.0
    %218 = vmatprep.subr.mxu0 0.0
    %219 = vmatpush1.msra.mxu0 0.0
    %220 = vmatprep.subr.mxu0 0.0
    %221 = vmatpush1.msra.mxu0 0.0
    %222 = vmatprep.subr.mxu0 0.0
    %223 = vmatpush1.msra.mxu0 0.0
    %224 = vmatprep.subr.mxu0 0.0
    %225 = vmatpush1.msra.mxu0 0.0
    %226 = vmatprep.subr.mxu0 0.0
    %227 = vmatpush1.msra.mxu0 0.0
    %228 = vmatprep.subr.mxu0 0.0
    %229 = vmatpush1.msra.mxu0 0.0
    %230 = vmatprep.subr.mxu0 0.0
    %231 = vmatpush1.msra.mxu0 0.0
    %232 = vmatprep.subr.mxu0 0.0
    %233 = vmatpush1.msra.mxu0 0.0
    %234 = vmatprep.subr.mxu0 0.0
    %235 = vmatpush1.msra.mxu0 0.0
    %236 = vmatprep.subr.mxu0 0.0
    %237 = vmatpush1.msra.mxu0 0.0
    %238 = vmatprep.subr.mxu0 0.0
    %239 = vmatpush1.msra.mxu0 0.0
    %240 = vmatprep.subr.mxu0 0.0
    %241 = vmatpush1.msra.mxu0 0.0
    %242 = vmatprep.subr.mxu0 0.0
    %243 = vmatpush1.msra.mxu0 0.0
    %244 = vmatprep.subr.mxu0 0.0
    %245 = vmatpush1.msra.mxu0 0.0
    %246 = vmatprep.subr.mxu0 0.0
    %247 = vmatpush1.msra.mxu0 0.0
    %248 = vmatprep.subr.mxu0 0.0
    %249 = vmatpush1.msra.mxu0 0.0
    %250 = vmatprep.subr.mxu0 0.0
    %251 = vmatpush1.msra.mxu0 0.0
    %252 = vmatprep.mubr.f32.mxu0 0.0
    %253 = vmatmul.mubr.f32.gmra.mrb[0].mxu0 %v111
    %v254 = vpop.f32.mrb[0].mxu0
    %v255 = vadd.f32 0.0, %v254
    %v256 = vpop.f32.mrb[0].mxu0
    %257 = vdwg.mxu0
    %vm258 = vcmask 64512
    %259 = vst.msk [vmem:[#allocation4] sm:$0xff] %vm258, %v255
    // Predicated region
    $region22: #{nnlinear_forward.1} parent=1 // pred_check
      _
    $region23: #{nnlinear_forward.1} parent=1 // pred_check_branch
      %261 = sbr.rel (0) target = $region25
    $region24: #{nnlinear_forward.1} parent=1 // pred_region
      %s263 = ssub.s32 128, 32
      %264 = vsyncadd [#allocation3], %s263
      %s265 = sshll.u32 [#allocation2], 4
      %s266 = int_to_ptr.vmem [resolvable:$true] %s265
      %271 = dma.vmem_to_hbm [thread:$0]  %s266, 32, %s5, [#allocation3], 32, 32, 2
    $region25: #{nnlinear_forward.1} parent=1 // pred_fallthru
      _
    // Predicated region
    $region26: #{nnlinear_forward.1} parent=1 // pred_check
      _
    $region27: #{nnlinear_forward.1} parent=1 // pred_check_branch
      %273 = sbr.rel (0) target = $region29
    $region28: #{nnlinear_forward.1} parent=1 // pred_region
      %s275 = ssub.s32 128, 32
      %276 = vsyncadd [#allocation5], %s275
      %s277 = sshll.u32 [#allocation4], 4
      %s278 = int_to_ptr.vmem [resolvable:$true] %s277
      %283 = dma.vmem_to_hbm [thread:$0]  %s278, 32, %s6, [#allocation5], 32, 32, 2
    $region29: #{nnlinear_forward.1} parent=1 // pred_fallthru
      _
    // Predicated region
    $region30: #{nnlinear_forward.1} parent=1 // pred_check
      _
    $region31: #{nnlinear_forward.1} parent=1 // pred_check_branch
      %285 = sbr.rel (0) target = $region33
    $region32: #{nnlinear_forward.1} parent=1 // pred_region
      %286 = dma.done [#allocation3], 128
    $region33: #{nnlinear_forward.1} parent=1 // pred_fallthru
      _
    // Predicated region
    $region34: #{nnlinear_forward.1} parent=1 // pred_check
      _
    $region35: #{nnlinear_forward.1} parent=1 // pred_check_branch
      %288 = sbr.rel (0) target = $region37
    $region36: #{nnlinear_forward.1} parent=1 // pred_region
      %289 = dma.done [#allocation5], 128
    $region37: #{nnlinear_forward.1} parent=1 // pred_fallthru
      _
    %290 = vsyncpa [#allocation3], 1
    %291 = vsyncpa [#allocation5], 1

</llo_original>
